<compile_context>
chip_gen: v6e
topology: v6e:2x2x1
jax: 0.10.0
libtpu: 0.0.40
codegen_flags: <defaults>
</compile_context>

<pallas_src>
import functools

import jax
import jax.numpy as jnp
from jax.experimental import pallas as pl
from jax.experimental.pallas import tpu as pltpu

EPSILON = 1e-5
COEFFICIENT = 5.0
LANES = 128
SUBLANES = 8
# 1024 rows x 128 lanes x 4 B = 512 KiB per input block; 2 inputs x 2 pipeline
# buffers = 2 MiB VMEM -> comfortably inside the scoped-VMEM defaults on
# v5e (16 MiB), v6e (32 MiB) and v7x (32 MiB scoped / 64 MiB physical).
MAX_TILE_ROWS = 1024


def _round_up(v, m):
    return ((v + m - 1) // m) * m


def _loss_kernel(x_ref, y_ref, out_ref, *, epsilon, coefficient, n_valid,
                 mask_tail, tile_rows):
    x = x_ref[...]
    y = y_ref[...]

    valid = ~jnp.isnan(y)                        # valid = ~torch.isnan(y)
    if mask_tail:
        # Inputs were zero-padded (no host-side NaN fill of y); mask the padded
        # tail in-kernel by global element index (cheap VPU compares).
        i = pl.program_id(0)
        row_ids = jax.lax.broadcasted_iota(jnp.int32, x.shape, 0)
        lane_ids = jax.lax.broadcasted_iota(jnp.int32, x.shape, 1)
        gidx = (i * tile_rows + row_ids) * LANES + lane_ids
        valid = jnp.logical_and(valid, gidx < n_valid)

    y_safe = jnp.where(valid, y, 1.0)            # keep NaNs out of the math

    r = jnp.abs((x + epsilon) / (y_safe + epsilon))
    # -log(2r / (r^2 + 1)) == log(r^2 + 1) - log(2r): trades the second exact
    # divide (EUP recip + Newton VPU refinement) for one extra EUP log, with no
    # accuracy loss.  (approx reciprocal was skipped to preserve rtol=1e-5.)
    alpha = jnp.log(r * r + 1.0) - jnp.log(2.0 * r)
    alpha = alpha * (1.0 + coefficient * jnp.exp(-r))

    contrib = jnp.where(valid, alpha, 0.0)       # masked-select -> masked-sum

    # Per-tile partial reduction: fold groups of 8 sublane rows onto a single
    # (8, 128) vreg with plain VPU adds; the full cross-lane reduce happens
    # once, outside the kernel.
    partial = contrib.reshape(tile_rows // SUBLANES, SUBLANES, LANES).sum(axis=0)
    out_ref[0] = partial


def loss_pallas(x, y, epsilon=EPSILON, coefficient=COEFFICIENT):
    assert x.shape == y.shape
    xf = jnp.ravel(x).astype(jnp.float32)
    yf = jnp.ravel(y).astype(jnp.float32)
    n = xf.size

    rows = _round_up(pl.cdiv(n, LANES), SUBLANES)
    tile_rows = min(MAX_TILE_ROWS, rows)      # toy sizes collapse to 1 grid step
    rows_padded = _round_up(rows, tile_rows)
    pad = rows_padded * LANES - n
    if pad:
        # Zero padding only; the tail is masked inside the kernel by index.
        xf = jnp.pad(xf, (0, pad))
        yf = jnp.pad(yf, (0, pad))

    x2d = xf.reshape(rows_padded, LANES)
    y2d = yf.reshape(rows_padded, LANES)
    num_tiles = rows_padded // tile_rows

    kernel = functools.partial(
        _loss_kernel, epsilon=epsilon, coefficient=coefficient, n_valid=n,
        mask_tail=(pad > 0), tile_rows=tile_rows)

    partials = pl.pallas_call(
        kernel,
        out_shape=jax.ShapeDtypeStruct((num_tiles, SUBLANES, LANES), jnp.float32),
        grid_spec=pltpu.PrefetchScalarGridSpec(
            num_scalar_prefetch=0,
            grid=(num_tiles,),
            in_specs=[
                pl.BlockSpec((tile_rows, LANES), lambda i: (i, 0)),
                pl.BlockSpec((tile_rows, LANES), lambda i: (i, 0)),
            ],
            out_specs=pl.BlockSpec((1, SUBLANES, LANES), lambda i: (i, 0, 0)),
        ),
        compiler_params=pltpu.CompilerParams(
            # Each tile writes its own output block -> grid steps are
            # independent; lets v7x shard tiles across both TensorCores.
            dimension_semantics=("parallel",)),
    )(x2d, y2d)

    # Tiny epilogue in XLA: num_tiles * 1024 floats.
    return jnp.sum(partials) / 4000.0            # beta = alpha.sum() / 4000


def loss_reference(x, y, epsilon=EPSILON, coefficient=COEFFICIENT):
    xf = jnp.ravel(x).astype(jnp.float32)
    yf = jnp.ravel(y).astype(jnp.float32)
    valid = ~jnp.isnan(yf)
    y_safe = jnp.where(valid, yf, 1.0)
    r = jnp.abs((xf + epsilon) / (y_safe + epsilon))
    alpha = -jnp.log(2.0 * r / (r * r + 1.0))
    alpha = alpha * (1.0 + coefficient * jnp.exp(-r))
    return jnp.sum(jnp.where(valid, alpha, 0.0)) / 4000.0


if __name__ == "__main__":
    key = jax.random.PRNGKey(0)
    kx, ky, kn = jax.random.split(key, 3)

    shape = (2, 4, 16, 16)
    x = jax.random.normal(kx, shape, dtype=jnp.float32)
    y = jax.random.normal(ky, shape, dtype=jnp.float32) + 1.0
    # sprinkle some NaNs into y to exercise the validity mask
    nan_mask = jax.random.bernoulli(kn, p=0.1, shape=shape)
    y = jnp.where(nan_mask, jnp.nan, y)

    beta = loss_pallas(x, y)
    jax.block_until_ready(beta)

    ref = loss_reference(x, y)
    assert jnp.allclose(beta, ref, rtol=1e-5, atol=1e-6), (beta, ref)

    print("KERNEL_OK")
</pallas_src>

<mosaic_0001>
module attributes {stable_mosaic.version = 11 : i64} {
  func.func @_loss_kernel(%arg0: i32, %arg1: memref<16x128xf32, #tpu.memory_space<vmem>>, %arg2: memref<16x128xf32, #tpu.memory_space<vmem>>, %arg3: memref<1x8x128xf32, #tpu.memory_space<vmem>>) attributes {dimension_semantics = [#tpu.dimension_semantics<parallel>], iteration_bounds = array<i64: 1>, scalar_prefetch = 0 : i64, scratch_operands = 0 : i64, tpu.core_type = #tpu.core_type<tc>, window_params = [{transform_indices = @transform_0, window_bounds = array<i64: 16, 128>}, {transform_indices = @transform_1, window_bounds = array<i64: 16, 128>}, {transform_indices = @transform_2, window_bounds = array<i64: 1, 8, 128>}]} {
    %c0 = arith.constant 0 : index
    %c0_0 = arith.constant 0 : index
    %0 = vector.load %arg1[%c0, %c0_0] : memref<16x128xf32, #tpu.memory_space<vmem>>, vector<16x128xf32>
    %c0_1 = arith.constant 0 : index
    %c0_2 = arith.constant 0 : index
    %1 = vector.load %arg2[%c0_1, %c0_2] : memref<16x128xf32, #tpu.memory_space<vmem>>, vector<16x128xf32>
    %2 = arith.cmpf one, %1, %1 : vector<16x128xf32>
    %cst = arith.constant dense<true> : vector<16x128xi1>
    %3 = arith.xori %2, %cst : vector<16x128xi1>
    %cst_3 = arith.constant 1.000000e+00 : f32
    %4 = vector.broadcast %cst_3 : f32 to vector<16x128xf32>
    %5 = arith.select %3, %1, %4 : vector<16x128xi1>, vector<16x128xf32>
    %cst_4 = arith.constant 9.99999974E-6 : f32
    %6 = vector.broadcast %cst_4 : f32 to vector<16x128xf32>
    %7 = arith.addf %0, %6 : vector<16x128xf32>
    %cst_5 = arith.constant 9.99999974E-6 : f32
    %8 = vector.broadcast %cst_5 : f32 to vector<16x128xf32>
    %9 = arith.addf %5, %8 : vector<16x128xf32>
    %10 = arith.divf %7, %9 : vector<16x128xf32>
    %11 = math.absf %10 : vector<16x128xf32>
    %12 = arith.mulf %11, %11 : vector<16x128xf32>
    %cst_6 = arith.constant 1.000000e+00 : f32
    %13 = vector.broadcast %cst_6 : f32 to vector<16x128xf32>
    %14 = arith.addf %12, %13 : vector<16x128xf32>
    %15 = math.log %14 : vector<16x128xf32>
    %cst_7 = arith.constant 2.000000e+00 : f32
    %16 = vector.broadcast %cst_7 : f32 to vector<16x128xf32>
    %17 = arith.mulf %16, %11 : vector<16x128xf32>
    %18 = math.log %17 : vector<16x128xf32>
    %19 = arith.subf %15, %18 : vector<16x128xf32>
    %cst_8 = arith.constant 0.000000e+00 : f32
    %20 = vector.broadcast %cst_8 : f32 to vector<16x128xf32>
    %21 = arith.subf %20, %11 : vector<16x128xf32>
    %22 = math.exp %21 : vector<16x128xf32>
    %cst_9 = arith.constant 5.000000e+00 : f32
    %23 = vector.broadcast %cst_9 : f32 to vector<16x128xf32>
    %24 = arith.mulf %23, %22 : vector<16x128xf32>
    %cst_10 = arith.constant 1.000000e+00 : f32
    %25 = vector.broadcast %cst_10 : f32 to vector<16x128xf32>
    %26 = arith.addf %25, %24 : vector<16x128xf32>
    %27 = arith.mulf %19, %26 : vector<16x128xf32>
    %cst_11 = arith.constant 0.000000e+00 : f32
    %28 = vector.broadcast %cst_11 : f32 to vector<16x128xf32>
    %29 = arith.select %3, %27, %28 : vector<16x128xi1>, vector<16x128xf32>
    %30 = vector.shape_cast %29 : vector<16x128xf32> to vector<2x8x128xf32>
    %cst_12 = arith.constant dense<0.000000e+00> : vector<8x128xf32>
    %31 = vector.multi_reduction <add>, %30, %cst_12 [0] : vector<2x8x128xf32> to vector<8x128xf32>
    %c0_13 = arith.constant 0 : index
    %c0_14 = arith.constant 0 : index
    %c0_15 = arith.constant 0 : index
    %32 = vector.load %arg3[%c0_13, %c0_14, %c0_15] : memref<1x8x128xf32, #tpu.memory_space<vmem>>, vector<1x8x128xf32>
    %33 = vector.shape_cast %32 : vector<1x8x128xf32> to vector<8x128xf32>
    %34 = vector.shape_cast %31 : vector<8x128xf32> to vector<1x8x128xf32>
    tpu.vector_store %arg3[%c0_13, %c0_14, %c0_15], %34 {strides = array<i32>} : memref<1x8x128xf32, #tpu.memory_space<vmem>>, vector<1x8x128xf32>,
    return
  }
  func.func @transform_0(%arg0: i32) -> (i32, i32) {
    %c0_i32 = arith.constant 0 : i32
    %c0_i32_0 = arith.constant 0 : i32
    return %arg0, %c0_i32 : i32, i32
  }
  func.func @transform_1(%arg0: i32) -> (i32, i32) {
    %c0_i32 = arith.constant 0 : i32
    %c0_i32_0 = arith.constant 0 : i32
    return %arg0, %c0_i32 : i32, i32
  }
  func.func @transform_2(%arg0: i32) -> (i32, i32, i32) {
    %c0_i32 = arith.constant 0 : i32
    %c0_i32_0 = arith.constant 0 : i32
    %c0_i32_1 = arith.constant 0 : i32
    return %arg0, %c0_i32, %c0_i32_0 : i32, i32, i32
  }
}

</mosaic_0001>

<llo_original>
// kernel: tpu_custom_call.1
$region0: #{tpu_custom_call.1}
  #allocation0 [shape = 'u32[]', space=smem, size = 0x4, offset = 0x4, fixed_abs, tag = 'smem constant byte address 0x4 - core index']
  #allocation1 [shape = 'u32[144,128]{1,0:T(1,128)}', space=vmem, size = 0x12000, scoped, tag = 'internal scratch']
  %s0 = inlined_call_operand.hbm [shape: f32[16,128], index: 0, kind: input, shape index: {}]
  %s1 = inlined_call_operand.hbm [shape: f32[16,128], index: 1, kind: input, shape index: {}]
  %s2 = inlined_call_operand.hbm [shape: f32[1,8,128], index: 2, kind: output, shape index: {}]
  %s3 = sld [smem:[#allocation0]]
  $region26: #{tpu_custom_call.1} parent=0
    _
  %s5 = ssub.s32 1, %s3
  %s6 = scalar_select 0, %s5, %s3
  $region1: #{tpu_custom_call.1} parent=0
    #allocation2 [shape = 'u8[8192]{0}', space=vmem, size = 0x2000, scoped, tag = 'input window, operand 0, single buffered']
    #allocation3 [shape = 's32[1]{0}', space=sflag, size = 0x4, scoped, tag = 'scoped memory for tpu_custom_call.1']
    #allocation4 [shape = 's32[1]{0}', space=sflag, size = 0x4, scoped, tag = 'scoped memory for tpu_custom_call.1']
    #allocation5 [shape = 'u8[8192]{0}', space=vmem, size = 0x2000, scoped, tag = 'input window, operand 1, single buffered']
    #allocation6 [shape = 's32[1]{0}', space=sflag, size = 0x4, scoped, tag = 'scoped memory for tpu_custom_call.1']
    #allocation7 [shape = 'u8[4096]{0}', space=vmem, size = 0x1000, scoped, tag = 'output window, operand 0, single buffered']
    %7 = vsyncpa [#allocation3], 0
    %8 = vsyncpa [#allocation6], 0
    %9 = vsyncpa [#allocation4], 0
    // Predicated region
    $region2: #{tpu_custom_call.1} parent=1 // pred_check
      _
    $region3: #{tpu_custom_call.1} parent=1 // pred_check_branch
      %11 = sbr.rel (0) target = $region5
    $region4: #{tpu_custom_call.1} parent=1 // pred_region
      %s13 = ssub.s32 256, 256
      %14 = vsyncadd [#allocation3], %s13
      %s15 = sshll.u32 [#allocation2], 4
      %s16 = int_to_ptr.vmem [resolvable:$true] %s15
      %21 = dma.hbm_to_vmem [thread:$0]  %s0, 256, %s16, [#allocation3], 128, 128, 8
    $region5: #{tpu_custom_call.1} parent=1 // pred_fallthru
      _
    // Predicated region
    $region6: #{tpu_custom_call.1} parent=1 // pred_check
      _
    $region7: #{tpu_custom_call.1} parent=1 // pred_check_branch
      %23 = sbr.rel (0) target = $region9
    $region8: #{tpu_custom_call.1} parent=1 // pred_region
      %s25 = ssub.s32 256, 256
      %26 = vsyncadd [#allocation6], %s25
      %s27 = sshll.u32 [#allocation5], 4
      %s28 = int_to_ptr.vmem [resolvable:$true] %s27
      %33 = dma.hbm_to_vmem [thread:$0]  %s1, 256, %s28, [#allocation6], 128, 128, 8
    $region9: #{tpu_custom_call.1} parent=1 // pred_fallthru
      _
    // Predicated region
    $region10: #{tpu_custom_call.1} parent=1 // pred_check
      _
    $region11: #{tpu_custom_call.1} parent=1 // pred_check_branch
      %35 = sbr.rel (0) target = $region13
    $region12: #{tpu_custom_call.1} parent=1 // pred_region
      %36 = dma.done [#allocation3], 256
    $region13: #{tpu_custom_call.1} parent=1 // pred_fallthru
      _
    // Predicated region
    $region14: #{tpu_custom_call.1} parent=1 // pred_check
      _
    $region15: #{tpu_custom_call.1} parent=1 // pred_check_branch
      %38 = sbr.rel (0) target = $region17
    $region16: #{tpu_custom_call.1} parent=1 // pred_region
      %39 = dma.done [#allocation6], 256
    $region17: #{tpu_custom_call.1} parent=1 // pred_fallthru
      _
    %v40 = vld [vmem:[#allocation2] sm:$0xff]
    %v41 = vld [vmem:[#allocation2 + $0x8] sm:$0xff]
    %v42 = vld [vmem:[#allocation5] sm:$0xff]
    %v43 = vld [vmem:[#allocation5 + $0x8] sm:$0xff]
    %vm44 = vcmp.ne.f32.partialorder %v42, %v42
    %vm45 = vcmp.ne.f32.partialorder %v43, %v43
    %vm46 = vmxor %vm44, 1
    %vm47 = vmxor %vm45, 1
    %v48 = vsel %vm46, %v42, 1.0
    %v49 = vsel %vm47, %v43, 1.0
    %v50 = vadd.f32 %v40, 1e-05
    %v51 = vadd.f32 %v41, 1e-05
    %v52 = vadd.f32 %v48, 1e-05
    %v53 = vadd.f32 %v49, 1e-05
    %v54 = vrcp.pop %v52
    %v55 = vmul.f32 %v50, %v54
    %v56 = vrcp.pop %v53
    %v57 = vmul.f32 %v51, %v56
    %v58 = vand.u32 2147483647, %v55
    %v59 = vand.u32 2147483647, %v57
    %v60 = vmul.f32 %v58, %v58
    %v61 = vmul.f32 %v59, %v59
    %v62 = vadd.f32 %v60, 1.0
    %v63 = vadd.f32 %v61, 1.0
    %v64 = vlog2.pop %v62
    %v65 = vmul.f32 %v64, 0.6931472
    %v66 = vlog2.pop %v63
    %v67 = vmul.f32 %v66, 0.6931472
    %v68 = vmul.f32 %v58, 2.0
    %v69 = vmul.f32 %v59, 2.0
    %v70 = vlog2.pop %v68
    %v71 = vmul.f32 %v70, 0.6931472
    %v72 = vlog2.pop %v69
    %v73 = vmul.f32 %v72, 0.6931472
    %v74 = vsub.f32 %v65, %v71
    %v75 = vsub.f32 %v67, %v73
    %v76 = vsub.f32 0.0, %v58
    %v77 = vsub.f32 0.0, %v59
    %v78 = vmul.f32 %v76, 1.442695
    %v79 = vpow.pop %v78
    %v80 = vmul.f32 %v77, 1.442695
    %v81 = vpow.pop %v80
    %v82 = vmul.f32 %v79, 5.0
    %v83 = vmul.f32 %v81, 5.0
    %v84 = vadd.f32 %v82, 1.0
    %v85 = vadd.f32 %v83, 1.0
    %v86 = vmul.f32 %v74, %v84
    %v87 = vmul.f32 %v75, %v85
    %v88 = vsel %vm46, %v86, 0.0
    %v89 = vsel %vm47, %v87, 0.0
    %v90 = vadd.f32 %v88, %v89
    %91 = vst [vmem:[#allocation7] sm:$0xff] %v90
    // Predicated region
    $region18: #{tpu_custom_call.1} parent=1 // pred_check
      _
    $region19: #{tpu_custom_call.1} parent=1 // pred_check_branch
      %93 = sbr.rel (0) target = $region21
    $region20: #{tpu_custom_call.1} parent=1 // pred_region
      %s95 = ssub.s32 128, 128
      %96 = vsyncadd [#allocation4], %s95
      %s98 = sshll.u32 [#allocation7], 4
      %s99 = int_to_ptr.vmem [resolvable:$true] %s98
      %101 = dma.vmem_to_hbm [thread:$0]  %s99, 128, %s2, [#allocation4]
    $region21: #{tpu_custom_call.1} parent=1 // pred_fallthru
      _
    // Predicated region
    $region22: #{tpu_custom_call.1} parent=1 // pred_check
      _
    $region23: #{tpu_custom_call.1} parent=1 // pred_check_branch
      %103 = sbr.rel (0) target = $region25
    $region24: #{tpu_custom_call.1} parent=1 // pred_region
      %104 = dma.done [#allocation4], 128
    $region25: #{tpu_custom_call.1} parent=1 // pred_fallthru
      _
    %105 = vsyncpa [#allocation3], 1
    %106 = vsyncpa [#allocation6], 1
    %107 = vsyncpa [#allocation4], 1

</llo_original>
